<compile_context>
chip_gen: v6e
topology: v6e:2x2x1
jax: 0.10.0
libtpu: 0.0.40
codegen_flags: <defaults>
</compile_context>

<pallas_src>
import math

import jax
import jax.numpy as jnp
import numpy as np
from jax.experimental import pallas as pl
from jax.experimental.pallas import tpu as pltpu


def _round_up(x, m):
    return ((x + m - 1) // m) * m


def _graph_linear_kernel(x_ref, w_ref, b_ref, o_ref):
    # x_ref: (rb, K)  w_ref: (K, F)  b_ref: (1, F) f32  o_ref: (rb, F)
    y = jnp.dot(x_ref[...], w_ref[...], preferred_element_type=jnp.float32)
    # tanh rides the EUP slot; the broadcast bias add rides the VPU; epilogue f32.
    o_ref[...] = (jnp.tanh(y) + b_ref[...]).astype(o_ref.dtype)


def _bake_transpose_into_weight(att, dim):
    """W[d*N + n, n2*D + d2] = att[n, n2] * (d == d2).

    x_flat @ W then equals PyTorch's (pos @ att).transpose(2,3).flatten(2)
    directly (output feature j = n2*D + d2), so the kernel writes the final
    lane-dense layout and no post-kernel transpose is needed.

    NOTE: this baking inflates MXU work by D (2*rows*D^2*N^2 flops) and the
    weight footprint by D^2.  At the small D*N here the kernel is HBM/overhead
    bound so it is a clear win; if production D*N grows to where the MXU
    ceiling is hit (v5e first) or W crowds v7x's 64 MiB VMEM, switch to per-d
    slabs x[:, d*N:(d+1)*N] @ att accumulated in VMEM instead.
    """
    n = att.shape[0]
    eye_d = jnp.eye(dim, dtype=att.dtype)
    w4 = att[None, :, :, None] * eye_d[:, None, None, :]     # (D, N, N, D)
    return w4.reshape(dim * n, n * dim)                      # (D*N, N*D)


def graph_linear_forward(pos, att, bias, *, row_block=4096,
                         compute_dtype=jnp.bfloat16, out_dtype=jnp.float32):
    """pos: (B, T, D, N); att: (N, N); bias: (N*D,) -> (B, T, N*D)."""
    B, T, D, N = pos.shape
    K = D * N                      # contraction width
    F = N * D                      # lane-dense output width
    rows = B * T

    # bf16 inputs by default: the kernel is HBM-bound on v5e/v6e/v7x, so halving
    # the dominant x read (and W bytes) is ~free -- accumulation and the
    # tanh+bias epilogue stay f32.  In the full model this cast fuses with the
    # upstream BiLSTM producer; callers that already hold bf16 activations pass
    # straight through (no extra copy).
    W = _bake_transpose_into_weight(att, D).astype(compute_dtype)     # (K, F)
    x_flat = pos.reshape(rows, K)                                     # free reshape
    if x_flat.dtype != compute_dtype:
        x_flat = x_flat.astype(compute_dtype)
    bias2 = bias.reshape(1, F).astype(jnp.float32)                    # tiny, resident

    # Row tiling: grid = cdiv(rows, rb); the ragged tail is masked by Pallas
    # (no explicit jnp.pad, no out[:rows] copy).  rb is a sublane multiple
    # (16 for packed bf16, 8 for f32); large single-block problems are split in
    # two so v7x's second TensorCore gets a "parallel" step of its own.
    sub = 16 if jnp.dtype(compute_dtype).itemsize == 2 else 8
    rb = min(row_block, rows)
    if rb == rows and rows >= 2048:
        rb = -(-rows // 2)
    rb = _round_up(max(rb, 1), sub)
    grid = (pl.cdiv(rows, rb),)

    ci = jnp.dtype(compute_dtype).itemsize
    co = jnp.dtype(out_dtype).itemsize

    # Explicit scoped-VMEM budget (v5e's default is only 16 MiB, v7x has 64 MiB
    # physical): lane dims pad to 128 and the pipeline double-buffers everything.
    vmem_needed = 2 * (rb * _round_up(K, 128) * ci                    # x blocks
                       + _round_up(K, 8) * _round_up(F, 128) * ci     # resident W
                       + rb * _round_up(F, 128) * co                  # out blocks
                       + 8 * _round_up(F, 128) * 4)                   # bias
    vmem_limit = int(min(64 * 2**20, max(vmem_needed + (2 << 20), 16 << 20)))

    cost = pl.CostEstimate(
        flops=2 * rows * K * F,
        transcendentals=rows * F,
        bytes_accessed=rows * K * ci + K * F * ci + rows * F * co + F * 4,
    )

    # NOTE: with F = N*D < 128 the output store is a masked vst.msk and each
    # x/out/tanh vreg carries only F valid lanes.  Deliberately NOT padded to
    # 128 in HBM: that would multiply the dominant HBM traffic of a
    # memory-bound kernel; the waste only disappears if the model width >= 128.
    out = pl.pallas_call(
        _graph_linear_kernel,
        out_shape=jax.ShapeDtypeStruct((rows, F), out_dtype),
        grid=grid,
        in_specs=[
            pl.BlockSpec((rb, K), lambda r: (r, 0)),    # row-tiled activations
            pl.BlockSpec((K, F), lambda r: (0, 0)),     # weight: constant block -> resident
            pl.BlockSpec((1, F), lambda r: (0, 0)),     # bias: resident
        ],
        out_specs=pl.BlockSpec((rb, F), lambda r: (r, 0)),
        compiler_params=pltpu.CompilerParams(
            dimension_semantics=("parallel",),
            vmem_limit_bytes=vmem_limit),
        cost_estimate=cost,
    )(x_flat, W, bias2)

    return out.reshape(B, T, F)


def get_laplacian(graph, normalize=True):
    deg = jnp.sum(graph, axis=-1)
    if normalize:
        # Guard degree-0 nodes so att never contains inf/NaN.
        safe = jnp.where(deg > 0, deg, 1.0) ** (-0.5)
        d = jnp.where(deg > 0, safe, 0.0)
        Dm = jnp.diag(d)
        return jnp.eye(graph.shape[0], dtype=graph.dtype) - Dm @ graph @ Dm
    return jnp.diag(deg) - graph


def make_params(key, input_node, out_size):
    """Deterministic synthetic parameters mirroring GraphLinear.__init__/reset_parameters."""
    k_adj, k_q, k_b = jax.random.split(key, 3)
    # synthetic binary symmetric adjacency without self loops (Adj and M)
    adj = (jax.random.uniform(k_adj, (input_node, input_node)) > 0.5).astype(jnp.float32)
    adj = jnp.maximum(adj, adj.T)
    adj = adj * (1.0 - jnp.eye(input_node, dtype=jnp.float32))
    M = adj
    Q = jax.random.uniform(k_q, (input_node, input_node),
                           minval=0.01, maxval=0.24, dtype=jnp.float32)
    A = adj * M + Q
    att = get_laplacian(A, normalize=True)
    stdv = 1.0 / math.sqrt(input_node * 9)
    bias = jax.random.uniform(k_b, (out_size,), minval=-stdv, maxval=stdv,
                              dtype=jnp.float32)
    return att, bias


if __name__ == "__main__":
    # Shapes consistent with Graph_up_RNN's GraphLinear input:
    #   pos = y.reshape(frame, batch, out_node, dim).transpose(2, 3)
    B, T, D, N = 2, 8, 4, 8            # batch, frames, dim-per-node, graph nodes
    out_size = N * D                   # forward implies out_size == N * D

    key = jax.random.PRNGKey(0)
    k_params, k_pos = jax.random.split(key)
    att, bias = make_params(k_params, input_node=N, out_size=out_size)
    pos = jax.random.normal(k_pos, (B, T, D, N), dtype=jnp.float32)

    # pure-JAX reference of the PyTorch GraphLinear forward
    def reference(p, a, b):
        r = jnp.matmul(p, a)
        r = jnp.transpose(r, (0, 1, 3, 2)).reshape(p.shape[0], p.shape[1], -1)
        return jnp.tanh(r) + b

    ref = np.asarray(reference(pos, att, bias))

    # Default path: bf16 inputs, f32 accumulation + f32 epilogue/output.
    out_bf16 = jax.block_until_ready(graph_linear_forward(pos, att, bias))
    np.testing.assert_allclose(np.asarray(out_bf16), ref, rtol=2e-2, atol=2e-2)

    # f32 path: matches the f32 PyTorch reference tightly.
    out_f32 = jax.block_until_ready(
        graph_linear_forward(pos, att, bias, compute_dtype=jnp.float32))
    np.testing.assert_allclose(np.asarray(out_f32), ref, rtol=1e-5, atol=1e-5)

    # Multi-block grid with a ragged trailing block (rows = 111, rb = 32 ->
    # grid = 4, last block masked).  No explicit padding anywhere.
    B2, T2 = 3, 37
    pos2 = jax.random.normal(jax.random.PRNGKey(1), (B2, T2, D, N),
                             dtype=jnp.float32)
    ref2 = np.asarray(reference(pos2, att, bias))
    out2 = jax.block_until_ready(
        graph_linear_forward(pos2, att, bias, row_block=32))
    np.testing.assert_allclose(np.asarray(out2), ref2, rtol=2e-2, atol=2e-2)

    print("KERNEL_OK")
</pallas_src>

<mosaic_0001>
module attributes {stable_mosaic.version = 11 : i64} {
  func.func @_graph_linear_kernel(%arg0: i32, %arg1: memref<16x32xbf16, #tpu.memory_space<vmem>>, %arg2: memref<32x32xbf16, #tpu.memory_space<vmem>>, %arg3: memref<1x32xf32, #tpu.memory_space<vmem>>, %arg4: memref<16x32xf32, #tpu.memory_space<vmem>>) attributes {dimension_semantics = [#tpu.dimension_semantics<parallel>], iteration_bounds = array<i64: 1>, scalar_prefetch = 0 : i64, scratch_operands = 0 : i64, tpu.core_type = #tpu.core_type<tc>, window_params = [{transform_indices = @transform_0, window_bounds = array<i64: 16, 32>}, {pipeline_mode = #tpu.pipeline_mode<synchronous>, transform_indices = @transform_1, window_bounds = array<i64: 32, 32>}, {pipeline_mode = #tpu.pipeline_mode<synchronous>, transform_indices = @transform_2, window_bounds = array<i64: 1, 32>}, {transform_indices = @transform_3, window_bounds = array<i64: 16, 32>}]} {
    %c0 = arith.constant 0 : index
    %c0_0 = arith.constant 0 : index
    %0 = vector.load %arg1[%c0, %c0_0] : memref<16x32xbf16, #tpu.memory_space<vmem>>, vector<16x32xbf16>
    %c0_1 = arith.constant 0 : index
    %c0_2 = arith.constant 0 : index
    %1 = vector.load %arg2[%c0_1, %c0_2] : memref<32x32xbf16, #tpu.memory_space<vmem>>, vector<32x32xbf16>
    %cst = arith.constant dense<0.000000e+00> : vector<16x32xf32>
    %2 = tpu.matmul %0, %1, %cst {dimension_numbers = #tpu.dot_dimension_numbers<[1], [0], [0], [1], [0, 0, 1, 1], [], []>} : vector<16x32xbf16>, vector<32x32xbf16>, vector<16x32xf32> -> vector<16x32xf32>
    %3 = math.tanh %2 : vector<16x32xf32>
    %c0_3 = arith.constant 0 : index
    %c0_4 = arith.constant 0 : index
    %4 = vector.load %arg3[%c0_3, %c0_4] : memref<1x32xf32, #tpu.memory_space<vmem>>, vector<1x32xf32>
    %5 = vector.broadcast %4 : vector<1x32xf32> to vector<16x32xf32>
    %6 = arith.addf %3, %5 : vector<16x32xf32>
    %c0_5 = arith.constant 0 : index
    %c0_6 = arith.constant 0 : index
    %7 = vector.load %arg4[%c0_5, %c0_6] : memref<16x32xf32, #tpu.memory_space<vmem>>, vector<16x32xf32>
    tpu.vector_store %arg4[%c0_5, %c0_6], %6 {strides = array<i32>} : memref<16x32xf32, #tpu.memory_space<vmem>>, vector<16x32xf32>,
    return
  }
  func.func @transform_0(%arg0: i32) -> (i32, i32) {
    %c0_i32 = arith.constant 0 : i32
    %c0_i32_0 = arith.constant 0 : i32
    return %arg0, %c0_i32 : i32, i32
  }
  func.func @transform_1(%arg0: i32) -> (i32, i32) {
    %c0_i32 = arith.constant 0 : i32
    %c0_i32_0 = arith.constant 0 : i32
    %c0_i32_1 = arith.constant 0 : i32
    return %c0_i32, %c0_i32_0 : i32, i32
  }
  func.func @transform_2(%arg0: i32) -> (i32, i32) {
    %c0_i32 = arith.constant 0 : i32
    %c0_i32_0 = arith.constant 0 : i32
    %c0_i32_1 = arith.constant 0 : i32
    return %c0_i32, %c0_i32_0 : i32, i32
  }
  func.func @transform_3(%arg0: i32) -> (i32, i32) {
    %c0_i32 = arith.constant 0 : i32
    %c0_i32_0 = arith.constant 0 : i32
    return %arg0, %c0_i32 : i32, i32
  }
}

</mosaic_0001>

<llo_original>
// kernel: tpu_custom_call.1
$region0: #{tpu_custom_call.1}
  #allocation0 [shape = 'u32[]', space=smem, size = 0x4, offset = 0x4, fixed_abs, tag = 'smem constant byte address 0x4 - core index']
  #allocation1 [shape = 'u32[144,128]{1,0:T(1,128)}', space=vmem, size = 0x12000, scoped, tag = 'internal scratch']
  %s0 = inlined_call_operand.hbm [shape: bf16[16,32], index: 0, kind: input, shape index: {}]
  %s1 = inlined_call_operand.hbm [shape: bf16[32,32], index: 1, kind: input, shape index: {}]
  %s2 = inlined_call_operand.vmem [shape: f32[1,32], index: 2, kind: input, shape index: {}]
  %s3 = inlined_call_operand.hbm [shape: f32[16,32], index: 3, kind: output, shape index: {}]
  %s4 = sld [smem:[#allocation0]]
  $region30: #{tpu_custom_call.1} parent=0
    _
  %s6 = ssub.s32 1, %s4
  %s7 = scalar_select 0, %s6, %s4
  $region1: #{tpu_custom_call.1} parent=0
    #allocation2 [shape = 'u8[4096]{0}', space=vmem, size = 0x1000, scoped, tag = 'input window, operand 0, single buffered']
    #allocation3 [shape = 's32[1]{0}', space=sflag, size = 0x4, scoped, tag = 'scoped memory for tpu_custom_call.1']
    #allocation4 [shape = 's32[1]{0}', space=sflag, size = 0x4, scoped, tag = 'scoped memory for tpu_custom_call.1']
    #allocation5 [shape = 'u8[8192]{0}', space=vmem, size = 0x2000, scoped, tag = 'input window, operand 1, single buffered']
    #allocation6 [shape = 's32[1]{0}', space=sflag, size = 0x4, scoped, tag = 'scoped memory for tpu_custom_call.1']
    #allocation7 [shape = 'u8[8192]{0}', space=vmem, size = 0x2000, scoped, tag = 'output window, operand 0, single buffered']
    %8 = vsyncpa [#allocation3], 0
    %9 = vsyncpa [#allocation6], 0
    %10 = vsyncpa [#allocation4], 0
    // Predicated region
    $region2: #{tpu_custom_call.1} parent=1 // pred_check
      _
    $region3: #{tpu_custom_call.1} parent=1 // pred_check_branch
      %12 = sbr.rel (0) target = $region5
    $region4: #{tpu_custom_call.1} parent=1 // pred_region
      %s14 = ssub.s32 128, 128
      %15 = vsyncadd [#allocation3], %s14
      %s16 = sshll.u32 [#allocation2], 4
      %s17 = int_to_ptr.vmem [resolvable:$true] %s16
      %22 = dma.hbm_to_vmem [thread:$0]  %s0, 128, %s17, [#allocation3], 64, 64, 4
    $region5: #{tpu_custom_call.1} parent=1 // pred_fallthru
      _
    // Predicated region
    $region6: #{tpu_custom_call.1} parent=1 // pred_check
      _
    $region7: #{tpu_custom_call.1} parent=1 // pred_check_branch
      %24 = sbr.rel (0) target = $region9
    $region8: #{tpu_custom_call.1} parent=1 // pred_region
      %s26 = ssub.s32 256, 256
      %27 = vsyncadd [#allocation6], %s26
      %s28 = sshll.u32 [#allocation5], 4
      %s29 = int_to_ptr.vmem [resolvable:$true] %s28
      %34 = dma.hbm_to_vmem [thread:$0]  %s1, 256, %s29, [#allocation6], 64, 64, 4
    $region9: #{tpu_custom_call.1} parent=1 // pred_fallthru
      _
    // Predicated region
    $region10: #{tpu_custom_call.1} parent=1 // pred_check
      _
    $region11: #{tpu_custom_call.1} parent=1 // pred_check_branch
      %36 = sbr.rel (0) target = $region13
    $region12: #{tpu_custom_call.1} parent=1 // pred_region
      _
    $region13: #{tpu_custom_call.1} parent=1 // pred_fallthru
      _
    // Predicated region
    $region14: #{tpu_custom_call.1} parent=1 // pred_check
      _
    $region15: #{tpu_custom_call.1} parent=1 // pred_check_branch
      %38 = sbr.rel (0) target = $region17
    $region16: #{tpu_custom_call.1} parent=1 // pred_region
      %39 = dma.done [#allocation3], 128
    $region17: #{tpu_custom_call.1} parent=1 // pred_fallthru
      _
    // Predicated region
    $region18: #{tpu_custom_call.1} parent=1 // pred_check
      _
    $region19: #{tpu_custom_call.1} parent=1 // pred_check_branch
      %41 = sbr.rel (0) target = $region21
    $region20: #{tpu_custom_call.1} parent=1 // pred_region
      %42 = dma.done [#allocation6], 256
    $region21: #{tpu_custom_call.1} parent=1 // pred_fallthru
      _
    %v44 = vld [vmem:[#allocation2] sm:$0xf]
    %v45 = vld [vmem:[#allocation2 + $0x4] sm:$0xf]
    %v46 = vld [vmem:[#allocation5] sm:$0xf]
    %v47 = vld [vmem:[#allocation5 + $0x4] sm:$0xf]
    %v48 = vld [vmem:[#allocation5 + $0x8] sm:$0xf]
    %v49 = vld [vmem:[#allocation5 + $0xc] sm:$0xf]
    %v52 = vunpack.c.l.b16 %v44
    %v53 = vunpack.c.l.b16 %v45
    %v54 = vpack.c.b16 %v53, %v52
    %v59 = vunpack.c.l.b16 %v46
    %v60 = vunpack.c.l.b16 %v47
    %v61 = vunpack.c.l.b16 %v48
    %v62 = vunpack.c.l.b16 %v49
    %v63 = vpack.c.b16 %v60, %v59
    %v64 = vpack.c.b16 %v62, %v61
    %vm67 = vcmask 261120
    %v69 = vsel %vm67, %v54, 0
    %71 = vmatprep.subr.bf16.mxu0 0
    %72 = vmatpush1.bf16.msra.mxu0 0
    %73 = vmatprep.subr.bf16.mxu0 0
    %74 = vmatpush1.bf16.msra.mxu0 0
    %75 = vmatprep.subr.bf16.mxu0 0
    %76 = vmatpush1.bf16.msra.mxu0 0
    %77 = vmatprep.subr.bf16.mxu0 0
    %78 = vmatpush1.bf16.msra.mxu0 0
    %79 = vmatprep.subr.bf16.mxu0 0
    %80 = vmatpush1.bf16.msra.mxu0 0
    %81 = vmatprep.subr.bf16.mxu0 0
    %82 = vmatpush1.bf16.msra.mxu0 0
    %83 = vmatprep.subr.bf16.mxu0 0
    %84 = vmatpush1.bf16.msra.mxu0 %v64
    %85 = vmatprep.subr.bf16.mxu0 0
    %86 = vmatpush1.bf16.msra.mxu0 %v63
    %87 = vmatprep.subr.bf16.mxu0 0
    %88 = vmatpush2.bf16.msra.mxu0 0
    %89 = vmatprep.subr.bf16.mxu0 0
    %90 = vmatpush2.bf16.msra.mxu0 0
    %91 = vmatprep.subr.bf16.mxu0 0
    %92 = vmatpush2.bf16.msra.mxu0 0
    %93 = vmatprep.subr.bf16.mxu0 0
    %94 = vmatpush2.bf16.msra.mxu0 0
    %95 = vmatprep.subr.bf16.mxu0 0
    %96 = vmatpush2.bf16.msra.mxu0 0
    %97 = vmatprep.subr.bf16.mxu0 0
    %98 = vmatpush2.bf16.msra.mxu0 0
    %99 = vmatprep.subr.bf16.mxu0 0
    %100 = vmatpush2.bf16.msra.mxu0 0
    %101 = vmatprep.subr.bf16.mxu0 0
    %102 = vmatpush2.bf16.msra.mxu0 0
    %103 = vmatprep.mubr.bf16.mxu0 0
    %104 = vmatmul.mubr.bf16.gmra.mxu0 %v69
    %v105 = vpop.f32.mrf.mxu0
    %v106 = vadd.f32 0.0, %v105
    %v107 = vpop.f32.mrf.mxu0
    %v108 = vpop.f32.mrf.mxu0
    %v109 = vadd.f32 0.0, %v108
    %v110 = vpop.f32.mrf.mxu0
    %111 = vdwg.mxu0
    %v112 = vtanh.pop %v106
    %v113 = vtanh.pop %v109
    %v114 = vld [vmem:[%s2] sm:$0x1]
    %v116 = vlaneseq
    %v117 = vshrl.u32 %v116, 7
    %v118 = vsub.s32 0, %v117
    %v119 = vrot.slane %v114, %v118
    %v121 = vadd.f32 %v112, %v119
    %v122 = vadd.f32 %v113, %v119
    %123 = vst.msk [vmem:[#allocation7] sm:$0xff] %vm67, %v121
    %124 = vst.msk [vmem:[#allocation7 + $0x8] sm:$0xff] %vm67, %v122
    // Predicated region
    $region22: #{tpu_custom_call.1} parent=1 // pred_check
      _
    $region23: #{tpu_custom_call.1} parent=1 // pred_check_branch
      %126 = sbr.rel (0) target = $region25
    $region24: #{tpu_custom_call.1} parent=1 // pred_region
      %s128 = ssub.s32 256, 256
      %129 = vsyncadd [#allocation4], %s128
      %s130 = sshll.u32 [#allocation7], 4
      %s131 = int_to_ptr.vmem [resolvable:$true] %s130
      %136 = dma.vmem_to_hbm [thread:$0]  %s131, 256, %s3, [#allocation4], 128, 128, 8
    $region25: #{tpu_custom_call.1} parent=1 // pred_fallthru
      _
    // Predicated region
    $region26: #{tpu_custom_call.1} parent=1 // pred_check
      _
    $region27: #{tpu_custom_call.1} parent=1 // pred_check_branch
      %138 = sbr.rel (0) target = $region29
    $region28: #{tpu_custom_call.1} parent=1 // pred_region
      %139 = dma.done [#allocation4], 256
    $region29: #{tpu_custom_call.1} parent=1 // pred_fallthru
      _
    %140 = vsyncpa [#allocation3], 1
    %141 = vsyncpa [#allocation6], 1
    %142 = vsyncpa [#allocation4], 1

</llo_original>
